<compile_context>
chip_gen: v6e
topology: v6e:2x2x1
jax: 0.10.0
libtpu: 0.0.40
codegen_flags: <defaults>
</compile_context>

<pallas_src>
import functools

import jax
import jax.numpy as jnp
from jax.experimental import pallas as pl
from jax.experimental.pallas import tpu as pltpu

_LANES = 128
_SUBLANES = 8
_VREG_ELEMS = _LANES * _SUBLANES  # 1024


def _gaussian_kernel(x_ref, o_ref, *, mu, inv_two_sigma_sq):
    # In-register promotion to f32 (free on the VPU under the HBM bound).
    x = x_ref[...].astype(jnp.float32)
    d = x - mu
    o_ref[...] = jnp.exp(-(d * d) * inv_two_sigma_sq)


def gaussian_kernel(x, mu: float = 1.0, sigma: float = 1.0, block_rows: int = 4096):
    """Pallas implementation of GaussianKernel.forward.

    Matches torch.exp(-(x - mu)^2 / (2 * sigma^2)); torch.FloatTensor([sigma])
    promotes the computation to float32, so the output is float32.
    """
    orig_shape = x.shape
    n = x.size

    two_sigma_sq = 2.0 * float(sigma) * float(sigma)
    # sigma == 0 matches torch's inf/nan behavior instead of raising.
    inv_two_sigma_sq = float("inf") if two_sigma_sq == 0.0 else 1.0 / two_sigma_sq

    flat = x.reshape(-1)                       # reshape of contiguous array: free
    n_pad = (-n) % _VREG_ELEMS                 # pad only to vreg granularity
    if n_pad:
        flat = jnp.pad(flat, (0, n_pad))
    rows = flat.size // _LANES                 # always a multiple of 8
    slab = flat.reshape(rows, _LANES)

    br = min(block_rows, rows)                 # clamp so tiny inputs are 1 step
    grid = (pl.cdiv(rows, br),)

    kernel = functools.partial(
        _gaussian_kernel, mu=float(mu), inv_two_sigma_sq=inv_two_sigma_sq
    )

    bytes_in = slab.size * slab.dtype.itemsize
    bytes_out = slab.size * 4

    out = pl.pallas_call(
        kernel,
        out_shape=jax.ShapeDtypeStruct((rows, _LANES), jnp.float32),
        grid_spec=pltpu.PrefetchScalarGridSpec(
            num_scalar_prefetch=0,
            grid=grid,
            in_specs=[pl.BlockSpec((br, _LANES), lambda i: (i, 0))],
            out_specs=pl.BlockSpec((br, _LANES), lambda i: (i, 0)),
        ),
        compiler_params=pltpu.CompilerParams(
            dimension_semantics=("parallel",),
        ),
        cost_estimate=pl.CostEstimate(
            flops=3 * n, transcendentals=n, bytes_accessed=bytes_in + bytes_out
        ),
    )(slab)

    if n_pad:
        return out.reshape(-1)[:n].reshape(orig_shape)
    return out.reshape(orig_shape)


if __name__ == "__main__":
    key = jax.random.PRNGKey(0)
    mu, sigma = 1.0, 1.0

    # NCHW input consistent with a typical feature map fed to this module.
    x = jax.random.normal(key, (2, 4, 16, 16), dtype=jnp.float32)
    y = gaussian_kernel(x, mu=mu, sigma=sigma)
    jax.block_until_ready(y)
    ref = jnp.exp(-jnp.square(x - mu) / (2.0 * sigma * sigma))
    assert y.shape == x.shape and y.dtype == jnp.float32
    assert jnp.allclose(y, ref, atol=1e-6, rtol=1e-6)

    # Non-multiple-of-1024 size exercises the minimal-pad path.
    x2 = jax.random.normal(jax.random.PRNGKey(1), (3, 5, 7), dtype=jnp.float32)
    y2 = gaussian_kernel(x2, mu=0.5, sigma=2.0)
    jax.block_until_ready(y2)
    ref2 = jnp.exp(-jnp.square(x2 - 0.5) / (2.0 * 2.0 * 2.0))
    assert y2.shape == x2.shape and jnp.allclose(y2, ref2, atol=1e-6, rtol=1e-6)

    # bf16 input: cast happens in-kernel, output is f32 (torch promotion).
    x3 = x.astype(jnp.bfloat16)
    y3 = gaussian_kernel(x3, mu=mu, sigma=sigma)
    jax.block_until_ready(y3)
    ref3 = jnp.exp(-jnp.square(x3.astype(jnp.float32) - mu) / (2.0 * sigma * sigma))
    assert y3.dtype == jnp.float32 and jnp.allclose(y3, ref3, atol=1e-3, rtol=1e-3)

    print("KERNEL_OK")
</pallas_src>

<mosaic_0001>
module attributes {stable_mosaic.version = 11 : i64} {
  func.func @_gaussian_kernel(%arg0: i32, %arg1: memref<16x128xf32, #tpu.memory_space<vmem>>, %arg2: memref<16x128xf32, #tpu.memory_space<vmem>>) attributes {dimension_semantics = [#tpu.dimension_semantics<parallel>], iteration_bounds = array<i64: 1>, scalar_prefetch = 0 : i64, scratch_operands = 0 : i64, tpu.core_type = #tpu.core_type<tc>, window_params = [{transform_indices = @transform_0, window_bounds = array<i64: 16, 128>}, {transform_indices = @transform_1, window_bounds = array<i64: 16, 128>}]} {
    %c0 = arith.constant 0 : index
    %c0_0 = arith.constant 0 : index
    %0 = vector.load %arg1[%c0, %c0_0] : memref<16x128xf32, #tpu.memory_space<vmem>>, vector<16x128xf32>
    %cst = arith.constant 1.000000e+00 : f32
    %1 = vector.broadcast %cst : f32 to vector<16x128xf32>
    %2 = arith.subf %0, %1 : vector<16x128xf32>
    %3 = arith.mulf %2, %2 : vector<16x128xf32>
    %cst_1 = arith.constant 0.000000e+00 : f32
    %4 = vector.broadcast %cst_1 : f32 to vector<16x128xf32>
    %5 = arith.subf %4, %3 : vector<16x128xf32>
    %cst_2 = arith.constant 5.000000e-01 : f32
    %6 = vector.broadcast %cst_2 : f32 to vector<16x128xf32>
    %7 = arith.mulf %5, %6 : vector<16x128xf32>
    %8 = math.exp %7 : vector<16x128xf32>
    %c0_3 = arith.constant 0 : index
    %c0_4 = arith.constant 0 : index
    %9 = vector.load %arg2[%c0_3, %c0_4] : memref<16x128xf32, #tpu.memory_space<vmem>>, vector<16x128xf32>
    tpu.vector_store %arg2[%c0_3, %c0_4], %8 {strides = array<i32>} : memref<16x128xf32, #tpu.memory_space<vmem>>, vector<16x128xf32>,
    return
  }
  func.func @transform_0(%arg0: i32) -> (i32, i32) {
    %c0_i32 = arith.constant 0 : i32
    %c0_i32_0 = arith.constant 0 : i32
    return %arg0, %c0_i32 : i32, i32
  }
  func.func @transform_1(%arg0: i32) -> (i32, i32) {
    %c0_i32 = arith.constant 0 : i32
    %c0_i32_0 = arith.constant 0 : i32
    return %arg0, %c0_i32 : i32, i32
  }
}

</mosaic_0001>

<llo_original>
// kernel: tpu_custom_call.1
$region0: #{tpu_custom_call.1}
  #allocation0 [shape = 'u32[]', space=smem, size = 0x4, offset = 0x4, fixed_abs, tag = 'smem constant byte address 0x4 - core index']
  #allocation1 [shape = 'u32[144,128]{1,0:T(1,128)}', space=vmem, size = 0x12000, scoped, tag = 'internal scratch']
  %s0 = inlined_call_operand.hbm [shape: f32[16,128], index: 0, kind: input, shape index: {}]
  %s1 = inlined_call_operand.hbm [shape: f32[16,128], index: 1, kind: output, shape index: {}]
  %s2 = sld [smem:[#allocation0]]
  $region18: #{tpu_custom_call.1} parent=0
    _
  %s4 = ssub.s32 1, %s2
  %s5 = scalar_select 0, %s4, %s2
  $region1: #{tpu_custom_call.1} parent=0
    #allocation2 [shape = 'u8[8192]{0}', space=vmem, size = 0x2000, scoped, tag = 'input window, operand 0, single buffered']
    #allocation3 [shape = 's32[1]{0}', space=sflag, size = 0x4, scoped, tag = 'scoped memory for tpu_custom_call.1']
    #allocation4 [shape = 's32[1]{0}', space=sflag, size = 0x4, scoped, tag = 'scoped memory for tpu_custom_call.1']
    #allocation5 [shape = 'u8[8192]{0}', space=vmem, size = 0x2000, scoped, tag = 'output window, operand 0, single buffered']
    %6 = vsyncpa [#allocation3], 0
    %7 = vsyncpa [#allocation4], 0
    // Predicated region
    $region2: #{tpu_custom_call.1} parent=1 // pred_check
      _
    $region3: #{tpu_custom_call.1} parent=1 // pred_check_branch
      %9 = sbr.rel (0) target = $region5
    $region4: #{tpu_custom_call.1} parent=1 // pred_region
      %s11 = ssub.s32 256, 256
      %12 = vsyncadd [#allocation3], %s11
      %s13 = sshll.u32 [#allocation2], 4
      %s14 = int_to_ptr.vmem [resolvable:$true] %s13
      %19 = dma.hbm_to_vmem [thread:$0]  %s0, 256, %s14, [#allocation3], 128, 128, 8
    $region5: #{tpu_custom_call.1} parent=1 // pred_fallthru
      _
    // Predicated region
    $region6: #{tpu_custom_call.1} parent=1 // pred_check
      _
    $region7: #{tpu_custom_call.1} parent=1 // pred_check_branch
      %21 = sbr.rel (0) target = $region9
    $region8: #{tpu_custom_call.1} parent=1 // pred_region
      %22 = dma.done [#allocation3], 256
    $region9: #{tpu_custom_call.1} parent=1 // pred_fallthru
      _
    %v23 = vld [vmem:[#allocation2] sm:$0xff]
    %v24 = vld [vmem:[#allocation2 + $0x8] sm:$0xff]
    %v25 = vsub.f32 %v23, 1.0
    %v26 = vsub.f32 %v24, 1.0
    %v27 = vmul.f32 %v25, %v25
    %v28 = vmul.f32 %v26, %v26
    %v29 = vsub.f32 0.0, %v27
    %v30 = vsub.f32 0.0, %v28
    %v31 = vmul.f32 %v29, 0.5
    %v32 = vmul.f32 %v30, 0.5
    %v33 = vmul.f32 %v31, 1.442695
    %v34 = vpow.pop %v33
    %v35 = vmul.f32 %v32, 1.442695
    %v36 = vpow.pop %v35
    %37 = vst [vmem:[#allocation5] sm:$0xff] %v34
    %38 = vst [vmem:[#allocation5 + $0x8] sm:$0xff] %v36
    // Predicated region
    $region10: #{tpu_custom_call.1} parent=1 // pred_check
      _
    $region11: #{tpu_custom_call.1} parent=1 // pred_check_branch
      %40 = sbr.rel (0) target = $region13
    $region12: #{tpu_custom_call.1} parent=1 // pred_region
      %s42 = ssub.s32 256, 256
      %43 = vsyncadd [#allocation4], %s42
      %s44 = sshll.u32 [#allocation5], 4
      %s45 = int_to_ptr.vmem [resolvable:$true] %s44
      %50 = dma.vmem_to_hbm [thread:$0]  %s45, 256, %s1, [#allocation4], 128, 128, 8
    $region13: #{tpu_custom_call.1} parent=1 // pred_fallthru
      _
    // Predicated region
    $region14: #{tpu_custom_call.1} parent=1 // pred_check
      _
    $region15: #{tpu_custom_call.1} parent=1 // pred_check_branch
      %52 = sbr.rel (0) target = $region17
    $region16: #{tpu_custom_call.1} parent=1 // pred_region
      %53 = dma.done [#allocation4], 256
    $region17: #{tpu_custom_call.1} parent=1 // pred_fallthru
      _
    %54 = vsyncpa [#allocation3], 1
    %55 = vsyncpa [#allocation4], 1

</llo_original>
